<compile_context>
chip_gen: v7x
topology: tpu7x:2x2x1
jax: 0.10.0
libtpu: 0.0.40
codegen_flags: <defaults>
</compile_context>

<pallas_src>
import numpy as np
import jax
import jax.numpy as jnp
from jax import lax
from jax.experimental import pallas as pl
from jax.experimental.pallas import tpu as pltpu


_LANES = 128
_SUBLANES = 8
_CHUNK_ROWS = 256            # rows per in-kernel accumulation chunk (128 KB f32)
_MAX_TILE_ROWS = 4096        # up to 2 MB f32 per input per grid step
_MIN_PALLAS_ELEMS = 1 << 18  # below this a fused XLA reduce beats a pallas_call


def _round_up(x, m):
    return -(-x // m) * m


def _make_bce_kernel(tile_rows, chunk_rows, valid_rows, need_mask):
    """Build a BCE-sum kernel for a (tile_rows, 128) block per grid step."""
    n_chunks = tile_rows // chunk_rows

    def kernel(p_ref, t_ref, out_ref):
        def chunk_sum(c, acc):
            start = c * chunk_rows
            if not isinstance(start, int):
                start = pl.multiple_of(start, chunk_rows)
            # Upcast in-register (supports bf16 storage at half the HBM bytes).
            p = p_ref[pl.ds(start, chunk_rows), :].astype(jnp.float32)
            t = t_ref[pl.ds(start, chunk_rows), :].astype(jnp.float32)
            if need_mask:
                # Mask the INPUTS before the logs: garbage (possibly NaN) rows of
                # the partial last block become p=1, t=1, which contributes
                # exactly 0 to the clamped BCE sum.
                base_row = pl.program_id(0) * tile_rows
                row_ids = (base_row + start
                           + lax.broadcasted_iota(jnp.int32, (chunk_rows, _LANES), 0))
                valid = row_ids < valid_rows
                p = jnp.where(valid, p, jnp.float32(1.0))
                t = jnp.where(valid, t, jnp.float32(1.0))
            # torch binary_cross_entropy clamps each log at -100 (no inf/NaN at 0/1).
            log_p = jnp.maximum(jnp.log(p), jnp.float32(-100.0))
            log_q = jnp.maximum(jnp.log(1.0 - p), jnp.float32(-100.0))
            elem = -(t * log_p + (1.0 - t) * log_q)
            # Collapse the chunk to an (8, 128) partial with pure VPU adds
            # (sublane-group sum; no cross-lane / XLU work in the kernel).
            return acc + jnp.sum(
                elem.reshape(chunk_rows // _SUBLANES, _SUBLANES, _LANES), axis=0)

        acc0 = jnp.zeros((_SUBLANES, _LANES), jnp.float32)
        if n_chunks == 1:
            out_ref[...] = chunk_sum(0, acc0)
        else:
            out_ref[...] = lax.fori_loop(0, n_chunks, chunk_sum, acc0)

    return kernel


def _bce_sum_pallas(pred, truth):
    """Pallas path: requires total element count divisible by 128."""
    pred = jnp.asarray(pred)
    truth = jnp.asarray(truth)
    n = pred.size
    assert n > 0 and n % _LANES == 0
    rows = n // _LANES

    def prep(x):
        if x.dtype not in (jnp.float32, jnp.bfloat16):
            x = x.astype(jnp.float32)
        return x.reshape(rows, _LANES)

    p2 = prep(pred)
    t2 = prep(truth)

    # Row alignment of the block: 8 for f32 tiles, 16 if any input is 2-byte.
    row_align = 16 if (p2.dtype.itemsize == 2 or t2.dtype.itemsize == 2) else _SUBLANES

    if rows <= 2 * _CHUNK_ROWS:
        # Tiny problem: single grid step, single chunk.
        tile_rows = _round_up(rows, row_align)
        chunk_rows = tile_rows
    else:
        chunk_rows = _CHUNK_ROWS
        # Cap at 2 MB f32 per input per step, but never make the tile so large
        # that the grid collapses to 1 step (keeps both v7x TensorCores busy).
        tile_rows = min(_MAX_TILE_ROWS, _round_up(-(-rows // 2), chunk_rows))

    grid = -(-rows // tile_rows)
    need_mask = (rows % tile_rows) != 0

    kernel = _make_bce_kernel(tile_rows, chunk_rows, rows, need_mask)

    partials = pl.pallas_call(
        kernel,
        out_shape=jax.ShapeDtypeStruct((grid * _SUBLANES, _LANES), jnp.float32),
        grid=(grid,),
        in_specs=[
            pl.BlockSpec((tile_rows, _LANES), lambda i: (i, 0)),
            pl.BlockSpec((tile_rows, _LANES), lambda i: (i, 0)),
        ],
        out_specs=pl.BlockSpec((_SUBLANES, _LANES), lambda i: (i, 0)),
        compiler_params=pltpu.CompilerParams(
            dimension_semantics=("parallel",)),  # independent partials -> megacore
        cost_estimate=pl.CostEstimate(
            flops=7 * n,
            transcendentals=2 * n,
            bytes_accessed=n * (p2.dtype.itemsize + t2.dtype.itemsize)
                           + grid * _SUBLANES * _LANES * 4),
    )(p2, t2)

    # Tiny final reduction over the (8*G, 128) partials in plain JAX.
    return jnp.sum(partials)


def _bce_sum_jnp(pred, truth):
    """Fused-XLA fallback with identical semantics."""
    p = jnp.asarray(pred, jnp.float32)
    t = jnp.asarray(truth, jnp.float32)
    log_p = jnp.maximum(jnp.log(p), jnp.float32(-100.0))
    log_q = jnp.maximum(jnp.log(1.0 - p), jnp.float32(-100.0))
    return jnp.sum(-(t * log_p + (1.0 - t) * log_q))


def bce_sum_loss(pred, truth, *, min_pallas_elems=_MIN_PALLAS_ELEMS):
    """Equivalent of Loss()(pred, truth) == F.binary_cross_entropy(..., reduction='sum')."""
    pred = jnp.asarray(pred)
    truth = jnp.asarray(truth)
    n = pred.size
    if n == 0:
        return jnp.float32(0.0)
    # Pallas path needs the flat element count divisible by the 128-lane width;
    # tiny inputs are dominated by launch/reshape plumbing -> fused XLA path.
    if (n % _LANES != 0) or (n < min_pallas_elems):
        return _bce_sum_jnp(pred, truth)
    return _bce_sum_pallas(pred, truth)


def _reference(pred, truth):
    # Numpy (float64) reference of torch F.binary_cross_entropy(..., reduction='sum').
    p = np.asarray(pred, dtype=np.float64)
    t = np.asarray(truth, dtype=np.float64)
    log_p = np.maximum(np.log(p), -100.0)
    log_q = np.maximum(np.log(1.0 - p), -100.0)
    return np.float32(np.sum(-(t * log_p + (1.0 - t) * log_q)))


if __name__ == "__main__":
    # Small shapes consistent with the module (it accepts any matching shapes).
    B, C, H, W = 2, 4, 16, 16
    key = jax.random.PRNGKey(0)
    k1, k2, k3, k4 = jax.random.split(key, 4)
    # pred lies in (0, 1) (output of a sigmoid in the original net).
    pred = 0.05 + 0.9 * jax.random.uniform(k1, (B, C, H, W), dtype=jnp.float32)
    truth = jax.random.uniform(k2, (B, C, H, W), dtype=jnp.float32)
    ref = _reference(pred, truth)

    # 1) Pallas path on the small test shape (forced; n = 2048, divisible by 128).
    loss_pallas = bce_sum_loss(pred, truth, min_pallas_elems=0)
    jax.block_until_ready(loss_pallas)
    np.testing.assert_allclose(np.asarray(loss_pallas), ref, rtol=1e-4, atol=1e-4)

    # 2) Pallas path with a partial last block (exercises the in-kernel mask).
    pred2 = 0.05 + 0.9 * jax.random.uniform(k3, (B, C, H, 20), dtype=jnp.float32)
    truth2 = jax.random.uniform(k4, (B, C, H, 20), dtype=jnp.float32)
    loss2 = bce_sum_loss(pred2, truth2, min_pallas_elems=0)
    jax.block_until_ready(loss2)
    np.testing.assert_allclose(np.asarray(loss2), _reference(pred2, truth2),
                               rtol=1e-4, atol=1e-4)

    # 3) bf16 inputs go straight through the kernel (upcast in-register).
    pred_bf = pred.astype(jnp.bfloat16)
    truth_bf = truth.astype(jnp.bfloat16)
    loss_bf = bce_sum_loss(pred_bf, truth_bf, min_pallas_elems=0)
    jax.block_until_ready(loss_bf)
    ref_bf = _reference(pred_bf.astype(jnp.float32), truth_bf.astype(jnp.float32))
    np.testing.assert_allclose(np.asarray(loss_bf), ref_bf, rtol=1e-4, atol=1e-4)

    # 4) Default dispatch (tiny input -> fused XLA fallback), same semantics.
    loss_small = bce_sum_loss(pred, truth)
    jax.block_until_ready(loss_small)
    np.testing.assert_allclose(np.asarray(loss_small), ref, rtol=1e-4, atol=1e-4)

    print("KERNEL_OK")
</pallas_src>

<mosaic_0001>
module attributes {stable_mosaic.version = 11 : i64} {
  func.func @kernel(%arg0: i32, %arg1: memref<16x128xf32, #tpu.memory_space<vmem>>, %arg2: memref<16x128xf32, #tpu.memory_space<vmem>>, %arg3: memref<8x128xf32, #tpu.memory_space<vmem>>) attributes {dimension_semantics = [#tpu.dimension_semantics<parallel>], iteration_bounds = array<i64: 1>, scalar_prefetch = 0 : i64, scratch_operands = 0 : i64, tpu.core_type = #tpu.core_type<tc>, window_params = [{transform_indices = @transform_0, window_bounds = array<i64: 16, 128>}, {transform_indices = @transform_1, window_bounds = array<i64: 16, 128>}, {transform_indices = @transform_2, window_bounds = array<i64: 8, 128>}]} {
    %cst = arith.constant 0.000000e+00 : f32
    %0 = vector.broadcast %cst : f32 to vector<8x128xf32>
    %c0 = arith.constant 0 : index
    %c0_0 = arith.constant 0 : index
    %1 = vector.load %arg1[%c0, %c0_0] : memref<16x128xf32, #tpu.memory_space<vmem>>, vector<16x128xf32>
    %c0_1 = arith.constant 0 : index
    %c0_2 = arith.constant 0 : index
    %2 = vector.load %arg2[%c0_1, %c0_2] : memref<16x128xf32, #tpu.memory_space<vmem>>, vector<16x128xf32>
    %3 = math.log %1 : vector<16x128xf32>
    %cst_3 = arith.constant -1.000000e+02 : f32
    %4 = vector.broadcast %cst_3 : f32 to vector<16x128xf32>
    %5 = arith.maximumf %3, %4 : vector<16x128xf32>
    %cst_4 = arith.constant 1.000000e+00 : f32
    %6 = vector.broadcast %cst_4 : f32 to vector<16x128xf32>
    %7 = arith.subf %6, %1 : vector<16x128xf32>
    %8 = math.log %7 : vector<16x128xf32>
    %cst_5 = arith.constant -1.000000e+02 : f32
    %9 = vector.broadcast %cst_5 : f32 to vector<16x128xf32>
    %10 = arith.maximumf %8, %9 : vector<16x128xf32>
    %11 = arith.mulf %2, %5 : vector<16x128xf32>
    %cst_6 = arith.constant 1.000000e+00 : f32
    %12 = vector.broadcast %cst_6 : f32 to vector<16x128xf32>
    %13 = arith.subf %12, %2 : vector<16x128xf32>
    %14 = arith.mulf %13, %10 : vector<16x128xf32>
    %15 = arith.addf %11, %14 : vector<16x128xf32>
    %cst_7 = arith.constant 0.000000e+00 : f32
    %16 = vector.broadcast %cst_7 : f32 to vector<16x128xf32>
    %17 = arith.subf %16, %15 : vector<16x128xf32>
    %18 = vector.shape_cast %17 : vector<16x128xf32> to vector<2x8x128xf32>
    %cst_8 = arith.constant dense<0.000000e+00> : vector<8x128xf32>
    %19 = vector.multi_reduction <add>, %18, %cst_8 [0] : vector<2x8x128xf32> to vector<8x128xf32>
    %20 = arith.addf %0, %19 : vector<8x128xf32>
    %c0_9 = arith.constant 0 : index
    %c0_10 = arith.constant 0 : index
    %21 = vector.load %arg3[%c0_9, %c0_10] : memref<8x128xf32, #tpu.memory_space<vmem>>, vector<8x128xf32>
    tpu.vector_store %arg3[%c0_9, %c0_10], %20 {strides = array<i32>} : memref<8x128xf32, #tpu.memory_space<vmem>>, vector<8x128xf32>,
    return
  }
  func.func @transform_0(%arg0: i32) -> (i32, i32) {
    %c0_i32 = arith.constant 0 : i32
    %c0_i32_0 = arith.constant 0 : i32
    return %arg0, %c0_i32 : i32, i32
  }
  func.func @transform_1(%arg0: i32) -> (i32, i32) {
    %c0_i32 = arith.constant 0 : i32
    %c0_i32_0 = arith.constant 0 : i32
    return %arg0, %c0_i32 : i32, i32
  }
  func.func @transform_2(%arg0: i32) -> (i32, i32) {
    %c0_i32 = arith.constant 0 : i32
    %c0_i32_0 = arith.constant 0 : i32
    return %arg0, %c0_i32 : i32, i32
  }
}

</mosaic_0001>

<llo_original>
// kernel: tpu_custom_call.1
$region0: #{tpu_custom_call.1}
  #allocation0 [shape = 'u32[]', space=smem, size = 0x4, offset = 0x4, fixed_abs, tag = 'smem constant byte address 0x4 - core index']
  #allocation1 [shape = 'u32[144,128]{1,0:T(1,128)}', space=vmem, size = 0x12000, scoped, tag = 'internal scratch']
  %s0 = inlined_call_operand.hbm [shape: f32[16,128], index: 0, kind: input, shape index: {}]
  %s1 = inlined_call_operand.hbm [shape: f32[16,128], index: 1, kind: input, shape index: {}]
  %s2 = inlined_call_operand.hbm [shape: f32[8,128], index: 2, kind: output, shape index: {}]
  %s3 = sld [smem:[#allocation0]]
  $region26: #{tpu_custom_call.1} parent=0
    _
  %s5 = ssub.s32 1, %s3
  %s6 = scalar_select 0, %s5, %s3
  $region1: #{tpu_custom_call.1} parent=0
    #allocation2 [shape = 'u8[8192]{0}', space=vmem, size = 0x2000, scoped, tag = 'input window, operand 0, single buffered']
    #allocation3 [shape = 's32[1]{0}', space=sflag, size = 0x4, scoped, tag = 'scoped memory for tpu_custom_call.1']
    #allocation4 [shape = 's32[1]{0}', space=sflag, size = 0x4, scoped, tag = 'scoped memory for tpu_custom_call.1']
    #allocation5 [shape = 'u8[8192]{0}', space=vmem, size = 0x2000, scoped, tag = 'input window, operand 1, single buffered']
    #allocation6 [shape = 's32[1]{0}', space=sflag, size = 0x4, scoped, tag = 'scoped memory for tpu_custom_call.1']
    #allocation7 [shape = 'u8[4096]{0}', space=vmem, size = 0x1000, scoped, tag = 'output window, operand 0, single buffered']
    %7 = vsyncpa [#allocation3], 0
    %8 = vsyncpa [#allocation6], 0
    %9 = vsyncpa [#allocation4], 0
    // Predicated region
    $region2: #{tpu_custom_call.1} parent=1 // pred_check
      _
    $region3: #{tpu_custom_call.1} parent=1 // pred_check_branch
      %11 = sbr.rel (0) target = $region5
    $region4: #{tpu_custom_call.1} parent=1 // pred_region
      %s13 = ssub.s32 256, 256
      %14 = vsyncadd [#allocation3], %s13
      %s15 = sshll.u32 [#allocation2], 4
      %s16 = int_to_ptr.vmem [resolvable:$true] %s15
      %21 = dma.hbm_to_vmem [thread:$0]  %s0, 256, %s16, [#allocation3], 128, 128, 8
    $region5: #{tpu_custom_call.1} parent=1 // pred_fallthru
      _
    // Predicated region
    $region6: #{tpu_custom_call.1} parent=1 // pred_check
      _
    $region7: #{tpu_custom_call.1} parent=1 // pred_check_branch
      %23 = sbr.rel (0) target = $region9
    $region8: #{tpu_custom_call.1} parent=1 // pred_region
      %s25 = ssub.s32 256, 256
      %26 = vsyncadd [#allocation6], %s25
      %s27 = sshll.u32 [#allocation5], 4
      %s28 = int_to_ptr.vmem [resolvable:$true] %s27
      %33 = dma.hbm_to_vmem [thread:$0]  %s1, 256, %s28, [#allocation6], 128, 128, 8
    $region9: #{tpu_custom_call.1} parent=1 // pred_fallthru
      _
    // Predicated region
    $region10: #{tpu_custom_call.1} parent=1 // pred_check
      _
    $region11: #{tpu_custom_call.1} parent=1 // pred_check_branch
      %35 = sbr.rel (0) target = $region13
    $region12: #{tpu_custom_call.1} parent=1 // pred_region
      %36 = dma.done [#allocation3], 256
    $region13: #{tpu_custom_call.1} parent=1 // pred_fallthru
      _
    // Predicated region
    $region14: #{tpu_custom_call.1} parent=1 // pred_check
      _
    $region15: #{tpu_custom_call.1} parent=1 // pred_check_branch
      %38 = sbr.rel (0) target = $region17
    $region16: #{tpu_custom_call.1} parent=1 // pred_region
      %39 = dma.done [#allocation6], 256
    $region17: #{tpu_custom_call.1} parent=1 // pred_fallthru
      _
    %v40 = vld [vmem:[#allocation2] sm:$0xff]
    %v41 = vld [vmem:[#allocation2 + $0x8] sm:$0xff]
    %v42 = vld [vmem:[#allocation5] sm:$0xff]
    %v43 = vld [vmem:[#allocation5 + $0x8] sm:$0xff]
    %v44 = vlog2.pop %v40
    %v45 = vmul.f32 %v44, 0.6931472
    %v46 = vlog2.pop %v41
    %v47 = vmul.f32 %v46, 0.6931472
    %v48 = vmax.f32 %v45, -100.0
    %v49 = vmax.f32 %v47, -100.0
    %v50 = vsub.f32 1.0, %v40
    %v51 = vsub.f32 1.0, %v41
    %v52 = vlog2.pop %v50
    %v53 = vmul.f32 %v52, 0.6931472
    %v54 = vlog2.pop %v51
    %v55 = vmul.f32 %v54, 0.6931472
    %v56 = vmax.f32 %v53, -100.0
    %v57 = vmax.f32 %v55, -100.0
    %v58 = vmul.f32 %v42, %v48
    %v59 = vmul.f32 %v43, %v49
    %v60 = vsub.f32 1.0, %v42
    %v61 = vsub.f32 1.0, %v43
    %v62 = vmul.f32 %v60, %v56
    %v63 = vmul.f32 %v61, %v57
    %v64 = vadd.f32 %v58, %v62
    %v65 = vadd.f32 %v59, %v63
    %v66 = vsub.f32 0.0, %v64
    %v67 = vsub.f32 0.0, %v65
    %v68 = vadd.f32 %v66, %v67
    %v69 = vadd.f32 %v68, 0.0
    %70 = vst [vmem:[#allocation7] sm:$0xff] %v69
    // Predicated region
    $region18: #{tpu_custom_call.1} parent=1 // pred_check
      _
    $region19: #{tpu_custom_call.1} parent=1 // pred_check_branch
      %72 = sbr.rel (0) target = $region21
    $region20: #{tpu_custom_call.1} parent=1 // pred_region
      %s74 = ssub.s32 128, 128
      %75 = vsyncadd [#allocation4], %s74
      %s77 = sshll.u32 [#allocation7], 4
      %s78 = int_to_ptr.vmem [resolvable:$true] %s77
      %80 = dma.vmem_to_hbm [thread:$0]  %s78, 128, %s2, [#allocation4]
    $region21: #{tpu_custom_call.1} parent=1 // pred_fallthru
      _
    // Predicated region
    $region22: #{tpu_custom_call.1} parent=1 // pred_check
      _
    $region23: #{tpu_custom_call.1} parent=1 // pred_check_branch
      %82 = sbr.rel (0) target = $region25
    $region24: #{tpu_custom_call.1} parent=1 // pred_region
      %83 = dma.done [#allocation4], 128
    $region25: #{tpu_custom_call.1} parent=1 // pred_fallthru
      _
    %84 = vsyncpa [#allocation3], 1
    %85 = vsyncpa [#allocation6], 1
    %86 = vsyncpa [#allocation4], 1

</llo_original>
